<compile_context>
chip_gen: v7x
topology: tpu7x:2x2x1
jax: 0.10.0
libtpu: 0.0.40
codegen_flags: <defaults>
</compile_context>

<pallas_src>
import functools

import jax
import jax.numpy as jnp
from jax import lax
from jax.experimental import pallas as pl
from jax.experimental.pallas import tpu as pltpu

LANES = 128
MAX_ROW_BLOCK = 2048      # <= 1 MiB f32 blocks on the tiled path
MIN_BLOCKS = 8            # >= 4 blocks per TensorCore on 2-TC chips (v7x)
SMALL_ROWS_MAX = 4096     # slab <= 2 MiB -> single fused kernel (one HBM read)
_PAD_FILL = float(jnp.finfo(jnp.float32).min)


def _round_up(a, b):
    return -(-a // b) * b


# ---------------------------------------------------------------------------
# Shared band-response body
# ---------------------------------------------------------------------------
def _band_response(u, params_ref, n_bands):
    """resp = sum_i g'_i * (1 + tanh(u - a_i)) * (1 - tanh(u - a_{i+1})).

    u = 0.5*sharp*eig/(max+1e-8), a_i = 0.5*sharp*bnd_i,
    g'_i = 0.25*sigmoid(band_responses_i)  (0.25 from sigmoid(z)=0.5*tanh(z/2)+0.5
    folded into the gain).  Exactly the reference
    sum_i sigmoid(band_resp_i) * sigmoid(sharp*(norm-bnd_i)) * sigmoid(sharp*(bnd_{i+1}-norm)).

    params_ref (SMEM f32) layout:
      [1 + i]             : a_i    for i in 0..n_bands
      [2 + n_bands + i]   : g'_i   for i in 0..n_bands-1
    """
    t_prev = jnp.tanh(u - params_ref[1])                      # edge 0
    resp = jnp.zeros_like(u)
    for i in range(n_bands):
        t_next = jnp.tanh(u - params_ref[2 + i])              # edge i+1
        resp = resp + params_ref[2 + n_bands + i] * ((1.0 + t_prev) * (1.0 - t_next))
        t_prev = t_next
    return jnp.clip(resp, 1e-6, 1.0)


# ---------------------------------------------------------------------------
# Kernels
# ---------------------------------------------------------------------------
def _max_kernel(x_ref, o_ref, *, valid_rows, row_block):
    # One independent (8, LANES) partial max per grid block ("parallel").
    x = x_ref[...]
    if valid_rows % row_block:
        # Ragged tail block: rows beyond `valid_rows` are undefined VMEM ->
        # mask them so they cannot corrupt the global max.
        base = pl.program_id(0) * row_block
        rid = base + lax.broadcasted_iota(jnp.int32, x.shape, 0)
        x = jnp.where(rid < valid_rows, x, _PAD_FILL)
    # Elementwise (VALU-only) fold over groups of 8 sublanes; the tiny
    # cross-lane/sublane reduce happens outside the kernel in plain JAX.
    o_ref[...] = jnp.max(x.reshape(-1, 8, x.shape[-1]), axis=0)


def _filter_kernel(params_ref, x_ref, o_ref, *, n_bands):
    # params_ref[0] = 0.5*sharp / (max + 1e-8), precomputed in the wrapper.
    o_ref[...] = _band_response(x_ref[...] * params_ref[0], params_ref, n_bands)


def _fused_kernel(params_ref, x_ref, o_ref, *, n_bands):
    # Small-N path: params_ref[0] = 0.5*sharp ; max computed in-kernel.
    # Pad lanes hold _PAD_FILL (never wins the max, tanh saturates harmlessly).
    x = x_ref[...]
    c = params_ref[0] / (jnp.max(x) + 1e-8)
    o_ref[...] = _band_response(x * c, params_ref, n_bands)


# ---------------------------------------------------------------------------
# Wrapper
# ---------------------------------------------------------------------------
def multi_scale_spectral_filter(eigenvalues, band_boundaries, band_responses,
                                transition_sharpness, n_bands=4):
    x = eigenvalues.astype(jnp.float32)
    n = x.shape[0]

    rows = -(-n // LANES)
    pad = rows * LANES - n
    if pad:
        # At most 127 fill elements (lane alignment only). Hugely negative fill
        # never wins the max; pad lanes are sliced off at the end.
        # TODO(synk): a fully pad-free path (memory_space=pl.ANY + manual DMA on
        # the raw 1D array) would also remove this copy and the final slice.
        x = jnp.pad(x, (0, pad), constant_values=_PAD_FILL)
    x2d = x.reshape(rows, LANES)

    # ---- parameter preprocessing (tiny, plain-JAX glue) --------------------
    sorted_b = jnp.sort(band_boundaries.astype(jnp.float32).reshape(-1))
    boundaries = jnp.concatenate(
        [jnp.zeros((1,), jnp.float32), sorted_b, jnp.ones((1,), jnp.float32)])
    half_sharp = 0.5 * (jnp.abs(transition_sharpness.astype(jnp.float32)) + 1.0)
    gains = 0.25 * jax.nn.sigmoid(band_responses.astype(jnp.float32).reshape(-1))
    offsets = half_sharp * boundaries                     # a_i, (n_bands+1,)

    smem_spec = pl.BlockSpec(memory_space=pltpu.MemorySpace.SMEM)

    if rows <= SMALL_ROWS_MAX:
        # ---- single fused launch: max + band response, one HBM read --------
        params = jnp.concatenate([jnp.reshape(half_sharp, (1,)), offsets, gains])
        full_spec = pl.BlockSpec((rows, LANES), lambda i: (0, 0))
        out2d = pl.pallas_call(
            functools.partial(_fused_kernel, n_bands=n_bands),
            out_shape=jax.ShapeDtypeStruct((rows, LANES), jnp.float32),
            grid=(1,),
            in_specs=[smem_spec, full_spec],
            out_specs=full_spec,
            compiler_params=pltpu.CompilerParams(
                dimension_semantics=("arbitrary",)),
        )(params, x2d)
        out = out2d.reshape(-1)
        return out[:n] if pad else out

    # ---- large-N two-pass path ----------------------------------------------
    # Big tiles for HBM efficiency, but always >= MIN_BLOCKS grid blocks so
    # both TensorCores (v7x) get >= 4 blocks each for load balance / pipelining.
    row_block = min(MAX_ROW_BLOCK, max(8, _round_up(-(-rows // MIN_BLOCKS), 8)))
    n_blocks = -(-rows // row_block)
    big_spec = pl.BlockSpec((row_block, LANES), lambda i: (i, 0))

    # pass 1: per-block VALU partial maxes, final reduce in plain JAX.
    partials = pl.pallas_call(
        functools.partial(_max_kernel, valid_rows=rows, row_block=row_block),
        out_shape=jax.ShapeDtypeStruct((n_blocks * 8, LANES), jnp.float32),
        grid=(n_blocks,),
        in_specs=[big_spec],
        out_specs=pl.BlockSpec((8, LANES), lambda i: (i, 0)),
        compiler_params=pltpu.CompilerParams(
            dimension_semantics=("parallel",)),
    )(x2d)
    max_val = jnp.max(partials)

    # pass 2: elementwise band response (ragged tail block's garbage rows are
    # computed harmlessly and dropped by Pallas on the edge write).
    c = half_sharp / (max_val + 1e-8)
    params = jnp.concatenate([jnp.reshape(c, (1,)), offsets, gains])
    out2d = pl.pallas_call(
        functools.partial(_filter_kernel, n_bands=n_bands),
        out_shape=jax.ShapeDtypeStruct((rows, LANES), jnp.float32),
        grid=(n_blocks,),
        in_specs=[smem_spec, big_spec],
        out_specs=big_spec,
        compiler_params=pltpu.CompilerParams(
            dimension_semantics=("parallel",)),
    )(params, x2d)
    out = out2d.reshape(-1)
    return out[:n] if pad else out


# ---------------------------------------------------------------------------
# Pure-JAX reference (mirrors the PyTorch forward exactly)
# ---------------------------------------------------------------------------
def _reference(eigenvalues, band_boundaries, band_responses,
               transition_sharpness, n_bands=4):
    eigenvalues = eigenvalues.astype(jnp.float32)
    max_e = jnp.max(eigenvalues) + 1e-8
    norm = eigenvalues / max_e
    sorted_b = jnp.sort(band_boundaries.astype(jnp.float32))
    boundaries = jnp.concatenate(
        [jnp.zeros((1,), jnp.float32), sorted_b, jnp.ones((1,), jnp.float32)])
    sharpness = jnp.abs(transition_sharpness.astype(jnp.float32)) + 1.0
    gains = jax.nn.sigmoid(band_responses.astype(jnp.float32))
    resp = jnp.zeros_like(norm)
    for i in range(n_bands):
        left, right = boundaries[i], boundaries[i + 1]
        lt = jax.nn.sigmoid(sharpness * (norm - left))
        rt = jax.nn.sigmoid(sharpness * (right - norm))
        resp = resp + gains[i] * (lt * rt)
    return jnp.clip(resp, 1e-6, 1.0)


if __name__ == "__main__":
    n_bands = 4
    # Parameter init matches the PyTorch module __init__.
    band_boundaries = jnp.linspace(0.0, 1.0, n_bands + 1)[1:-1].astype(jnp.float32)
    band_responses = jnp.full((n_bands,), 0.5, jnp.float32)
    transition_sharpness = jnp.asarray(10.0, jnp.float32)

    key = jax.random.PRNGKey(0)
    k1, k2 = jax.random.split(key)

    # Small-N fused path, ragged length (exercises lane padding + slice).
    eig_small = jax.random.uniform(k1, (1000,), jnp.float32) * 2.0
    out = multi_scale_spectral_filter(eig_small, band_boundaries, band_responses,
                                      transition_sharpness, n_bands=n_bands)
    out = jax.block_until_ready(out)
    ref = _reference(eig_small, band_boundaries, band_responses,
                     transition_sharpness, n_bands=n_bands)
    assert out.shape == eig_small.shape
    assert jnp.allclose(out, ref, atol=1e-5, rtol=1e-5), \
        float(jnp.max(jnp.abs(out - ref)))

    # Large-N two-pass tiled path, ragged length (lane pad + ragged tail block).
    eig_big = jax.random.uniform(k2, (600_001,), jnp.float32) * 5.0
    out_b = multi_scale_spectral_filter(eig_big, band_boundaries, band_responses,
                                        transition_sharpness, n_bands=n_bands)
    out_b = jax.block_until_ready(out_b)
    ref_b = _reference(eig_big, band_boundaries, band_responses,
                       transition_sharpness, n_bands=n_bands)
    assert out_b.shape == eig_big.shape
    assert jnp.allclose(out_b, ref_b, atol=1e-5, rtol=1e-5), \
        float(jnp.max(jnp.abs(out_b - ref_b)))

    print("KERNEL_OK")
</pallas_src>

<mosaic_0001>
module attributes {stable_mosaic.version = 11 : i64} {
  func.func @_fused_kernel(%arg0: i32, %arg1: memref<10xf32, #tpu.memory_space<smem>>, %arg2: memref<8x128xf32, #tpu.memory_space<vmem>>, %arg3: memref<8x128xf32, #tpu.memory_space<vmem>>) attributes {dimension_semantics = [#tpu.dimension_semantics<arbitrary>], iteration_bounds = array<i64: 1>, scalar_prefetch = 0 : i64, scratch_operands = 0 : i64, tpu.core_type = #tpu.core_type<tc>, window_params = [{transform_indices = @transform_0, window_bounds = array<i64: 10>}, {pipeline_mode = #tpu.pipeline_mode<synchronous>, transform_indices = @transform_1, window_bounds = array<i64: 8, 128>}, {pipeline_mode = #tpu.pipeline_mode<synchronous>, transform_indices = @transform_2, window_bounds = array<i64: 8, 128>}]} {
    %c0 = arith.constant 0 : index
    %c0_0 = arith.constant 0 : index
    %0 = vector.load %arg2[%c0, %c0_0] : memref<8x128xf32, #tpu.memory_space<vmem>>, vector<8x128xf32>
    %c0_1 = arith.constant 0 : index
    %1 = memref.load %arg1[%c0_1] : memref<10xf32, #tpu.memory_space<smem>>
    %2 = vector.shape_cast %0 : vector<8x128xf32> to vector<1x8x128xf32>
    %cst = arith.constant dense<0xFF800000> : vector<1xf32>
    %3 = vector.multi_reduction <maximumf>, %2, %cst [1, 2] : vector<1x8x128xf32> to vector<1xf32>
    %4 = vector.shape_cast %3 : vector<1xf32> to vector<1x1x1xf32>
    %5 = vector.extract %4[0, 0, 0] : f32 from vector<1x1x1xf32>
    %cst_2 = arith.constant 9.99999993E-9 : f32
    %6 = arith.addf %5, %cst_2 : f32
    %7 = arith.divf %1, %6 : f32
    %8 = vector.broadcast %7 : f32 to vector<8x128xf32>
    %9 = arith.mulf %0, %8 : vector<8x128xf32>
    %c1 = arith.constant 1 : index
    %10 = memref.load %arg1[%c1] : memref<10xf32, #tpu.memory_space<smem>>
    %11 = vector.broadcast %10 : f32 to vector<8x128xf32>
    %12 = arith.subf %9, %11 : vector<8x128xf32>
    %13 = math.tanh %12 : vector<8x128xf32>
    %cst_3 = arith.constant 0.000000e+00 : f32
    %14 = vector.broadcast %cst_3 : f32 to vector<8x128xf32>
    %c2 = arith.constant 2 : index
    %15 = memref.load %arg1[%c2] : memref<10xf32, #tpu.memory_space<smem>>
    %16 = vector.broadcast %15 : f32 to vector<8x128xf32>
    %17 = arith.subf %9, %16 : vector<8x128xf32>
    %18 = math.tanh %17 : vector<8x128xf32>
    %c6 = arith.constant 6 : index
    %19 = memref.load %arg1[%c6] : memref<10xf32, #tpu.memory_space<smem>>
    %cst_4 = arith.constant 1.000000e+00 : f32
    %20 = vector.broadcast %cst_4 : f32 to vector<8x128xf32>
    %21 = arith.addf %20, %13 : vector<8x128xf32>
    %cst_5 = arith.constant 1.000000e+00 : f32
    %22 = vector.broadcast %cst_5 : f32 to vector<8x128xf32>
    %23 = arith.subf %22, %18 : vector<8x128xf32>
    %24 = arith.mulf %21, %23 : vector<8x128xf32>
    %25 = vector.broadcast %19 : f32 to vector<8x128xf32>
    %26 = arith.mulf %25, %24 : vector<8x128xf32>
    %27 = arith.addf %14, %26 : vector<8x128xf32>
    %c3 = arith.constant 3 : index
    %28 = memref.load %arg1[%c3] : memref<10xf32, #tpu.memory_space<smem>>
    %29 = vector.broadcast %28 : f32 to vector<8x128xf32>
    %30 = arith.subf %9, %29 : vector<8x128xf32>
    %31 = math.tanh %30 : vector<8x128xf32>
    %c7 = arith.constant 7 : index
    %32 = memref.load %arg1[%c7] : memref<10xf32, #tpu.memory_space<smem>>
    %cst_6 = arith.constant 1.000000e+00 : f32
    %33 = vector.broadcast %cst_6 : f32 to vector<8x128xf32>
    %34 = arith.addf %33, %18 : vector<8x128xf32>
    %cst_7 = arith.constant 1.000000e+00 : f32
    %35 = vector.broadcast %cst_7 : f32 to vector<8x128xf32>
    %36 = arith.subf %35, %31 : vector<8x128xf32>
    %37 = arith.mulf %34, %36 : vector<8x128xf32>
    %38 = vector.broadcast %32 : f32 to vector<8x128xf32>
    %39 = arith.mulf %38, %37 : vector<8x128xf32>
    %40 = arith.addf %27, %39 : vector<8x128xf32>
    %c4 = arith.constant 4 : index
    %41 = memref.load %arg1[%c4] : memref<10xf32, #tpu.memory_space<smem>>
    %42 = vector.broadcast %41 : f32 to vector<8x128xf32>
    %43 = arith.subf %9, %42 : vector<8x128xf32>
    %44 = math.tanh %43 : vector<8x128xf32>
    %c8 = arith.constant 8 : index
    %45 = memref.load %arg1[%c8] : memref<10xf32, #tpu.memory_space<smem>>
    %cst_8 = arith.constant 1.000000e+00 : f32
    %46 = vector.broadcast %cst_8 : f32 to vector<8x128xf32>
    %47 = arith.addf %46, %31 : vector<8x128xf32>
    %cst_9 = arith.constant 1.000000e+00 : f32
    %48 = vector.broadcast %cst_9 : f32 to vector<8x128xf32>
    %49 = arith.subf %48, %44 : vector<8x128xf32>
    %50 = arith.mulf %47, %49 : vector<8x128xf32>
    %51 = vector.broadcast %45 : f32 to vector<8x128xf32>
    %52 = arith.mulf %51, %50 : vector<8x128xf32>
    %53 = arith.addf %40, %52 : vector<8x128xf32>
    %c5 = arith.constant 5 : index
    %54 = memref.load %arg1[%c5] : memref<10xf32, #tpu.memory_space<smem>>
    %55 = vector.broadcast %54 : f32 to vector<8x128xf32>
    %56 = arith.subf %9, %55 : vector<8x128xf32>
    %57 = math.tanh %56 : vector<8x128xf32>
    %c9 = arith.constant 9 : index
    %58 = memref.load %arg1[%c9] : memref<10xf32, #tpu.memory_space<smem>>
    %cst_10 = arith.constant 1.000000e+00 : f32
    %59 = vector.broadcast %cst_10 : f32 to vector<8x128xf32>
    %60 = arith.addf %59, %44 : vector<8x128xf32>
    %cst_11 = arith.constant 1.000000e+00 : f32
    %61 = vector.broadcast %cst_11 : f32 to vector<8x128xf32>
    %62 = arith.subf %61, %57 : vector<8x128xf32>
    %63 = arith.mulf %60, %62 : vector<8x128xf32>
    %64 = vector.broadcast %58 : f32 to vector<8x128xf32>
    %65 = arith.mulf %64, %63 : vector<8x128xf32>
    %66 = arith.addf %53, %65 : vector<8x128xf32>
    %cst_12 = arith.constant 9.99999997E-7 : f32
    %cst_13 = arith.constant 1.000000e+00 : f32
    %67 = vector.broadcast %cst_12 : f32 to vector<8x128xf32>
    %68 = arith.maximumf %67, %66 : vector<8x128xf32>
    %69 = vector.broadcast %cst_13 : f32 to vector<8x128xf32>
    %70 = arith.minimumf %69, %68 : vector<8x128xf32>
    %c0_14 = arith.constant 0 : index
    %c0_15 = arith.constant 0 : index
    %71 = vector.load %arg3[%c0_14, %c0_15] : memref<8x128xf32, #tpu.memory_space<vmem>>, vector<8x128xf32>
    tpu.vector_store %arg3[%c0_14, %c0_15], %70 {strides = array<i32>} : memref<8x128xf32, #tpu.memory_space<vmem>>, vector<8x128xf32>,
    return
  }
  func.func @transform_0(%arg0: i32) -> i32 {
    %c0_i32 = arith.constant 0 : i32
    %c0_i32_0 = arith.constant 0 : i32
    return %c0_i32 : i32
  }
  func.func @transform_1(%arg0: i32) -> (i32, i32) {
    %c0_i32 = arith.constant 0 : i32
    %c0_i32_0 = arith.constant 0 : i32
    %c0_i32_1 = arith.constant 0 : i32
    return %c0_i32, %c0_i32_0 : i32, i32
  }
  func.func @transform_2(%arg0: i32) -> (i32, i32) {
    %c0_i32 = arith.constant 0 : i32
    %c0_i32_0 = arith.constant 0 : i32
    %c0_i32_1 = arith.constant 0 : i32
    return %c0_i32, %c0_i32_0 : i32, i32
  }
}

</mosaic_0001>

<llo_original>
// kernel: tpu_custom_call.1
$region0: #{tpu_custom_call.1}
  #allocation0 [shape = 'u32[]', space=smem, size = 0x4, offset = 0x4, fixed_abs, tag = 'smem constant byte address 0x4 - core index']
  #allocation1 [shape = 'u32[144,128]{1,0:T(1,128)}', space=vmem, size = 0x12000, scoped, tag = 'internal scratch']
  %s0 = inlined_call_operand.hbm [shape: f32[10], index: 0, kind: input, shape index: {}]
  %s1 = inlined_call_operand.hbm [shape: f32[8,128], index: 1, kind: input, shape index: {}]
  %s2 = inlined_call_operand.hbm [shape: f32[8,128], index: 2, kind: output, shape index: {}]
  %s3 = sld [smem:[#allocation0]]
  $region26: #{tpu_custom_call.1} parent=0
    _
  %s5 = ssub.s32 1, %s3
  %s6 = scalar_select 0, %s5, %s3
  $region1: #{tpu_custom_call.1} parent=0
    #allocation2 [shape = 'u8[512]{0}', space=smem, size = 0x200, scoped, tag = 'input window, operand 0, single buffered']
    #allocation3 [shape = 's32[1]{0}', space=sflag, size = 0x4, scoped, tag = 'scoped memory for tpu_custom_call.1']
    #allocation4 [shape = 's32[1]{0}', space=sflag, size = 0x4, scoped, tag = 'scoped memory for tpu_custom_call.1']
    #allocation5 [shape = 's32[1]{0}', space=sflag, size = 0x4, scoped, tag = 'scoped memory for tpu_custom_call.1']
    #allocation6 [shape = 'u8[4096]{0}', space=vmem, size = 0x1000, scoped, tag = 'input window, operand 1, single buffered']
    #allocation7 [shape = 'u8[4096]{0}', space=vmem, size = 0x1000, scoped, tag = 'output window, operand 0, single buffered']
    %7 = vsyncpa [#allocation5], 0
    %8 = vsyncpa [#allocation3], 0
    %9 = vsyncpa [#allocation4], 0
    // Predicated region
    $region2: #{tpu_custom_call.1} parent=1 // pred_check
      _
    $region3: #{tpu_custom_call.1} parent=1 // pred_check_branch
      %11 = sbr.rel (0) target = $region5
    $region4: #{tpu_custom_call.1} parent=1 // pred_region
      %s13 = ssub.s32 16, 16
      %14 = vsyncadd [#allocation5], %s13
      %17 = dma.hbm_to_smem %s0, 16, [#allocation2], [#allocation5]
    $region5: #{tpu_custom_call.1} parent=1 // pred_fallthru
      _
    // Predicated region
    $region6: #{tpu_custom_call.1} parent=1 // pred_check
      _
    $region7: #{tpu_custom_call.1} parent=1 // pred_check_branch
      %19 = sbr.rel (0) target = $region9
    $region8: #{tpu_custom_call.1} parent=1 // pred_region
      %s21 = ssub.s32 128, 128
      %22 = vsyncadd [#allocation3], %s21
      %s24 = sshll.u32 [#allocation6], 4
      %s25 = int_to_ptr.vmem [resolvable:$true] %s24
      %27 = dma.hbm_to_vmem [thread:$0]  %s1, 128, %s25, [#allocation3]
    $region9: #{tpu_custom_call.1} parent=1 // pred_fallthru
      _
    // Predicated region
    $region10: #{tpu_custom_call.1} parent=1 // pred_check
      _
    $region11: #{tpu_custom_call.1} parent=1 // pred_check_branch
      %29 = sbr.rel (0) target = $region13
    $region12: #{tpu_custom_call.1} parent=1 // pred_region
      %30 = dma.done [#allocation5], 16
    $region13: #{tpu_custom_call.1} parent=1 // pred_fallthru
      _
    // Predicated region
    $region14: #{tpu_custom_call.1} parent=1 // pred_check
      _
    $region15: #{tpu_custom_call.1} parent=1 // pred_check_branch
      %32 = sbr.rel (0) target = $region17
    $region16: #{tpu_custom_call.1} parent=1 // pred_region
      %33 = dma.done [#allocation3], 128
    $region17: #{tpu_custom_call.1} parent=1 // pred_fallthru
      _
    %34 = sfence
    %v35 = vld [vmem:[#allocation6] sm:$0xff]
    %s36 = sld [smem:[#allocation2]]
    %37 = vmax.xlane.f32.xlu0 %v35
    %v38 = vpop.xlane.xlu0 %37
    %v39 = vrot.slane %v38, 4
    %v40 = vmax.f32 %v38, %v39
    %v41 = vrot.slane %v40, 2
    %v42 = vmax.f32 %v40, %v41
    %v43 = vrot.slane %v42, 1
    %v44 = vmax.f32 %v42, %v43
    %s45 = vtos %v44
    %s46 = sadd.f32 %s45, 1e-08
    %v47 = vstv %s46
    %v48 = vrcp.pop %v47
    %s49 = vtos %v48
    %s50 = smul.f32 %s36, %s49
    %v51 = vstv %s50
    %v52 = vmul.f32 %v35, %v51
    %s53 = sld [smem:[#allocation2 + $0x1]]
    %v54 = vstv %s53
    %v55 = vsub.f32 %v52, %v54
    %v56 = vtanh.pop %v55
    %s57 = sld [smem:[#allocation2 + $0x2]]
    %v58 = vstv %s57
    %v59 = vsub.f32 %v52, %v58
    %v60 = vtanh.pop %v59
    %s61 = sld [smem:[#allocation2 + $0x6]]
    %v62 = vadd.f32 %v56, 1.0
    %v63 = vsub.f32 1.0, %v60
    %v64 = vmul.f32 %v62, %v63
    %v65 = vstv %s61
    %v66 = vmul.f32 %v65, %v64
    %v67 = vadd.f32 %v66, 0.0
    %s68 = sld [smem:[#allocation2 + $0x3]]
    %v69 = vstv %s68
    %v70 = vsub.f32 %v52, %v69
    %v71 = vtanh.pop %v70
    %s72 = sld [smem:[#allocation2 + $0x7]]
    %v73 = vadd.f32 %v60, 1.0
    %v74 = vsub.f32 1.0, %v71
    %v75 = vmul.f32 %v73, %v74
    %v76 = vstv %s72
    %v77 = vmul.f32 %v76, %v75
    %v78 = vadd.f32 %v67, %v77
    %s79 = sld [smem:[#allocation2 + $0x4]]
    %v80 = vstv %s79
    %v81 = vsub.f32 %v52, %v80
    %v82 = vtanh.pop %v81
    %s83 = sld [smem:[#allocation2 + $0x8]]
    %v84 = vadd.f32 %v71, 1.0
    %v85 = vsub.f32 1.0, %v82
    %v86 = vmul.f32 %v84, %v85
    %v87 = vstv %s83
    %v88 = vmul.f32 %v87, %v86
    %v89 = vadd.f32 %v78, %v88
    %s90 = sld [smem:[#allocation2 + $0x5]]
    %v91 = vstv %s90
    %v92 = vsub.f32 %v52, %v91
    %v93 = vtanh.pop %v92
    %s94 = sld [smem:[#allocation2 + $0x9]]
    %v95 = vadd.f32 %v82, 1.0
    %v96 = vsub.f32 1.0, %v93
    %v97 = vmul.f32 %v95, %v96
    %v98 = vstv %s94
    %v99 = vmul.f32 %v98, %v97
    %v100 = vadd.f32 %v89, %v99
    %v101 = vmax.f32 %v100, 1e-06
    %v102 = vmin.f32 %v101, 1.0
    %103 = vst [vmem:[#allocation7] sm:$0xff] %v102
    // Predicated region
    $region18: #{tpu_custom_call.1} parent=1 // pred_check
      _
    $region19: #{tpu_custom_call.1} parent=1 // pred_check_branch
      %105 = sbr.rel (0) target = $region21
    $region20: #{tpu_custom_call.1} parent=1 // pred_region
      %s107 = ssub.s32 128, 128
      %108 = vsyncadd [#allocation4], %s107
      %s110 = sshll.u32 [#allocation7], 4
      %s111 = int_to_ptr.vmem [resolvable:$true] %s110
      %113 = dma.vmem_to_hbm [thread:$0]  %s111, 128, %s2, [#allocation4]
    $region21: #{tpu_custom_call.1} parent=1 // pred_fallthru
      _
    // Predicated region
    $region22: #{tpu_custom_call.1} parent=1 // pred_check
      _
    $region23: #{tpu_custom_call.1} parent=1 // pred_check_branch
      %115 = sbr.rel (0) target = $region25
    $region24: #{tpu_custom_call.1} parent=1 // pred_region
      %116 = dma.done [#allocation4], 128
    $region25: #{tpu_custom_call.1} parent=1 // pred_fallthru
      _
    %117 = vsyncpa [#allocation3], 1
    %118 = vsyncpa [#allocation4], 1
    %119 = vsyncpa [#allocation5], 1

</llo_original>
